<compile_context>
chip_gen: v7x
topology: tpu7x:2x2x1
jax: 0.10.0
libtpu: 0.0.40
codegen_flags: <defaults>
</compile_context>

<pallas_src>
import functools

import numpy as np
import jax
import jax.numpy as jnp
from jax.experimental import pallas as pl
from jax.experimental.pallas import tpu as pltpu


# ----------------------------------------------------------------------------
# Module hyper-parameters (mirrors DeepBSpline.__init__ with defaults)
# ----------------------------------------------------------------------------
SIZE = 51                 # must be odd
RANGE_ = 4.0
NUM_ACTIVATIONS = 4       # = number of conv channels
INIT = "leaky_relu"

LANES = 128               # TPU lane width


def spline_grid_from_range(spline_size, range_, round_to=1e-6):
    """grid = range_ / (size // 2), floored to `round_to` (as in deepsplines)."""
    spline_grid = ((range_ / (spline_size // 2)) // round_to) * round_to
    return float(spline_grid)


def init_coefficients(num_activations, size, grid, init="leaky_relu"):
    """Deterministic coefficient init, identical to the PyTorch module."""
    half = size // 2
    grid_arange = jnp.arange(-half, half + 1, dtype=jnp.float32) * grid   # (size,)
    grid_tensor = jnp.broadcast_to(grid_arange, (num_activations, size))  # (C, size)
    if init == "leaky_relu":
        coefficients = jnp.where(grid_tensor >= 0, grid_tensor, 0.1 * grid_tensor)
    elif init == "relu":
        coefficients = jnp.maximum(grid_tensor, 0.0)
    else:
        # TODO(synk): 'even_odd' init (abs / softshrink split) not needed for demo.
        raise ValueError("unsupported init")
    return coefficients.astype(jnp.float32)  # coefficients_vect = coefficients.reshape(-1)


def _round_up(a, b):
    return (a + b - 1) // b * b


# ----------------------------------------------------------------------------
# ReLU-basis tables (exact re-expression of the linear spline + extrapolation)
# ----------------------------------------------------------------------------
def _relu_basis_tables(coefficients, grid, size):
    """f_c(x) = b_c + s_c * x + sum_{k=1}^{size-2} a_{c,k} * max(x, t_k),
    t_k = (k - size//2) * grid.

    Identical (in exact arithmetic) to linear B-spline interpolation on
    [t_0, t_{size-2}] plus the module's linear extrapolation outside that range.
    Computed in float64 so the tables carry the exact slope changes of the
    float32 coefficient table.
    """
    c = np.asarray(coefficients, dtype=np.float64)            # (C, size)
    g = float(grid)
    half = size // 2
    t = (np.arange(size, dtype=np.float64) - half) * g        # knot positions
    s = (c[:, 1] - c[:, 0]) / g                               # (C,)   leftmost slope
    a = (c[:, 2:] - 2.0 * c[:, 1:-1] + c[:, :-2]) / g         # (C, size-2) slope changes
    b = c[:, 0] - s * t[0] - a @ t[1:-1]                      # (C,)   folded constants
    return (jnp.asarray(s, dtype=jnp.float32),
            jnp.asarray(b, dtype=jnp.float32),
            jnp.asarray(a, dtype=jnp.float32))


# ----------------------------------------------------------------------------
# Pallas kernel
# ----------------------------------------------------------------------------
def _deep_bspline_kernel(s_ref, b_ref, a_ref, x_ref, o_ref, *,
                         grid, size, chunk_rows, num_chunks):
    """ReLU-basis linear-spline activation for one (spatial-tile, n, c) block.

    s_ref: (C,)           SMEM  leftmost-segment slope per channel
    b_ref: (C,)           SMEM  per-channel bias (knot constants folded in)
    a_ref: (C, size-2)    SMEM  per-knot slope changes (2nd finite diff / grid)
    x_ref: (1, 1, tile_rows, 128)  VMEM  lane-dense input block
    o_ref: (1, 1, tile_rows, 128)  VMEM
    """
    c = pl.program_id(2)
    half = size // 2
    s = s_ref[c]
    b = b_ref[c]

    @pl.loop(0, num_chunks)
    def _(j):
        r0 = pl.multiple_of(j * chunk_rows, chunk_rows)
        x = x_ref[0, 0, pl.ds(r0, chunk_rows), :]              # (chunk_rows, 128) f32
        acc = x * s + b
        # Unrolled knot loop: one max / mul / add per interior knot, single
        # live accumulator.  Extrapolation outside the knot range is implicit.
        for k in range(1, size - 1):
            t_k = float((k - half) * grid)                     # knot position constant
            acc = acc + a_ref[c, k - 1] * jnp.maximum(x, t_k)
        o_ref[0, 0, pl.ds(r0, chunk_rows), :] = acc


def deep_bspline_forward(x, coefficients, grid, size, *,
                         max_tile_rows=1024, target_chunk_rows=128):
    """x: (N, C, H, W) float32, coefficients: (C, size) float32."""
    N, C, H, W = x.shape
    assert C == coefficients.shape[0] and coefficients.shape[1] == size
    assert x.dtype == jnp.float32
    HW = H * W

    # ---- lane-dense layout: (N, C, rows, 128), no transpose ------------------
    rows = int(pl.cdiv(HW, LANES))
    if rows <= target_chunk_rows:
        chunk_rows = rows                 # full extent -> no (8,128) alignment needed
        tile_rows = rows
    else:
        chunk_rows = int(target_chunk_rows)                       # multiple of 8
        tile_rows = min(_round_up(rows, chunk_rows),
                        _round_up(max_tile_rows, chunk_rows))
    num_chunks = tile_rows // chunk_rows
    rows_padded = _round_up(rows, tile_rows)
    hw_padded = rows_padded * LANES

    x_flat = x.reshape(N, C, HW)
    if hw_padded != HW:                                            # tail pad only
        x_flat = jnp.pad(x_flat, ((0, 0), (0, 0), (0, hw_padded - HW)))
    x_tiled = x_flat.reshape(N, C, rows_padded, LANES)             # metadata reshape

    # Per-channel ReLU-basis tables (tiny, live in SMEM for the whole call).
    s_tab, b_tab, a_tab = _relu_basis_tables(coefficients, grid, size)

    kernel = functools.partial(
        _deep_bspline_kernel,
        grid=float(grid), size=int(size),
        chunk_rows=int(chunk_rows), num_chunks=int(num_chunks),
    )

    spec = pl.BlockSpec((1, 1, tile_rows, LANES), lambda m, n, c: (n, c, m, 0))
    out_tiled = pl.pallas_call(
        kernel,
        out_shape=jax.ShapeDtypeStruct((N, C, rows_padded, LANES), x.dtype),
        grid=(rows_padded // tile_rows, N, C),          # spatial axis leading (v7x split)
        in_specs=[
            pl.BlockSpec(memory_space=pltpu.MemorySpace.SMEM),     # s
            pl.BlockSpec(memory_space=pltpu.MemorySpace.SMEM),     # b
            pl.BlockSpec(memory_space=pltpu.MemorySpace.SMEM),     # a
            spec,
        ],
        out_specs=spec,
        compiler_params=pltpu.CompilerParams(
            dimension_semantics=("parallel", "parallel", "parallel")),
    )(s_tab, b_tab, a_tab, x_tiled)

    out_flat = out_tiled.reshape(N, C, hw_padded)
    if hw_padded != HW:
        out_flat = out_flat[:, :, :HW]
    return out_flat.reshape(N, C, H, W)


# ----------------------------------------------------------------------------
# Pure-JAX reference (direct transcription of DeepBSpline_Func.forward +
# the extrapolation term added in DeepBSpline.forward when save_memory=False)
# ----------------------------------------------------------------------------
def deep_bspline_reference(x, coefficients, grid, size):
    N, C, H, W = x.shape
    half = size // 2
    cv = coefficients.reshape(-1)                                 # coefficients_vect
    zero_knot_indexes = jnp.arange(C) * size + half

    x_clamped = jnp.clip(x, -grid * half, grid * (half - 1))
    floored = jnp.floor(x_clamped / grid)
    fracs = x_clamped / grid - floored
    indexes = (zero_knot_indexes.reshape(1, C, 1, 1) + floored).astype(jnp.int32)
    out = cv[indexes + 1] * fracs + cv[indexes] * (1.0 - fracs)

    leftmost_slope = ((coefficients[:, 1] - coefficients[:, 0]) / grid).reshape(1, C, 1, 1)
    rightmost_slope = ((coefficients[:, -1] - coefficients[:, -2]) / grid).reshape(1, C, 1, 1)
    left_ext = jnp.minimum(x + grid * half, 0.0) * leftmost_slope
    right_ext = jnp.maximum(x - grid * (half - 1), 0.0) * rightmost_slope
    return out + left_ext + right_ext


# ----------------------------------------------------------------------------
# Demo
# ----------------------------------------------------------------------------
if __name__ == "__main__":
    spline_grid = spline_grid_from_range(SIZE, RANGE_)           # 0.16
    coefficients = init_coefficients(NUM_ACTIVATIONS, SIZE, spline_grid, INIT)

    key = jax.random.PRNGKey(0)
    # conv mode: NCHW input, C == num_activations; scale to exercise both the
    # in-range interpolation and the out-of-range linear extrapolation paths.
    x = 3.0 * jax.random.normal(key, (2, NUM_ACTIVATIONS, 16, 16), dtype=jnp.float32)

    out = deep_bspline_forward(x, coefficients, spline_grid, SIZE)
    out = jax.block_until_ready(out)

    ref = deep_bspline_reference(x, coefficients, spline_grid, SIZE)
    assert out.shape == x.shape and out.dtype == x.dtype
    # ReLU-basis evaluation re-associates the sum; error stays well below 1e-5
    # (tables are derived in float64 from the same float32 coefficients).
    assert jnp.allclose(out, ref, atol=1e-5, rtol=1e-5), float(jnp.max(jnp.abs(out - ref)))

    print("KERNEL_OK")
</pallas_src>

<mosaic_0001>
module attributes {stable_mosaic.version = 11 : i64} {
  func.func @_deep_bspline_kernel(%arg0: i32, %arg1: i32, %arg2: i32, %arg3: memref<4xf32, #tpu.memory_space<smem>>, %arg4: memref<4xf32, #tpu.memory_space<smem>>, %arg5: memref<4x49xf32, #tpu.memory_space<smem>>, %arg6: memref<1x1x2x128xf32, #tpu.memory_space<vmem>>, %arg7: memref<1x1x2x128xf32, #tpu.memory_space<vmem>>) attributes {dimension_semantics = [#tpu.dimension_semantics<parallel>, #tpu.dimension_semantics<parallel>, #tpu.dimension_semantics<parallel>], iteration_bounds = array<i64: 1, 2, 4>, scalar_prefetch = 0 : i64, scratch_operands = 0 : i64, tpu.core_type = #tpu.core_type<tc>, window_params = [{transform_indices = @transform_0, window_bounds = array<i64: 4>}, {transform_indices = @transform_1, window_bounds = array<i64: 4>}, {transform_indices = @transform_2, window_bounds = array<i64: 4, 49>}, {transform_indices = @transform_3, window_bounds = array<i64: 1, 1, 2, 128>}, {transform_indices = @transform_4, window_bounds = array<i64: 1, 1, 2, 128>}]} {
    %0 = arith.index_cast %arg2 : i32 to index
    %1 = memref.load %arg3[%0] : memref<4xf32, #tpu.memory_space<smem>>
    %2 = arith.index_cast %arg2 : i32 to index
    %3 = memref.load %arg4[%2] : memref<4xf32, #tpu.memory_space<smem>>
    %c0_i32 = arith.constant 0 : i32
    %c1_i32 = arith.constant 1 : i32
    %4 = arith.muli %c0_i32, %c1_i32 : i32
    %c0_i32_0 = arith.constant 0 : i32
    %5 = arith.addi %c0_i32_0, %4 : i32
    %c2_i32 = arith.constant 2 : i32
    %6 = arith.muli %5, %c2_i32 : i32
    %7 = tpu.assume_multiple %6, 2 : i32
    %c0 = arith.constant 0 : index
    %c0_1 = arith.constant 0 : index
    %8 = arith.index_cast %7 : i32 to index
    %c0_2 = arith.constant 0 : index
    %9 = vector.load %arg6[%c0, %c0_1, %8, %c0_2] : memref<1x1x2x128xf32, #tpu.memory_space<vmem>>, vector<1x1x2x128xf32>
    %10 = vector.shape_cast %9 : vector<1x1x2x128xf32> to vector<2x128xf32>
    %11 = vector.broadcast %1 : f32 to vector<2x128xf32>
    %12 = arith.mulf %10, %11 : vector<2x128xf32>
    %13 = vector.broadcast %3 : f32 to vector<2x128xf32>
    %14 = arith.addf %12, %13 : vector<2x128xf32>
    %15 = arith.index_cast %arg2 : i32 to index
    %c0_3 = arith.constant 0 : index
    %16 = memref.load %arg5[%15, %c0_3] : memref<4x49xf32, #tpu.memory_space<smem>>
    %cst = arith.constant -3.840000e+00 : f32
    %17 = vector.broadcast %cst : f32 to vector<2x128xf32>
    %18 = arith.maximumf %10, %17 : vector<2x128xf32>
    %19 = vector.broadcast %16 : f32 to vector<2x128xf32>
    %20 = arith.mulf %19, %18 : vector<2x128xf32>
    %21 = arith.addf %14, %20 : vector<2x128xf32>
    %22 = arith.index_cast %arg2 : i32 to index
    %c1 = arith.constant 1 : index
    %23 = memref.load %arg5[%22, %c1] : memref<4x49xf32, #tpu.memory_space<smem>>
    %cst_4 = arith.constant -3.680000e+00 : f32
    %24 = vector.broadcast %cst_4 : f32 to vector<2x128xf32>
    %25 = arith.maximumf %10, %24 : vector<2x128xf32>
    %26 = vector.broadcast %23 : f32 to vector<2x128xf32>
    %27 = arith.mulf %26, %25 : vector<2x128xf32>
    %28 = arith.addf %21, %27 : vector<2x128xf32>
    %29 = arith.index_cast %arg2 : i32 to index
    %c2 = arith.constant 2 : index
    %30 = memref.load %arg5[%29, %c2] : memref<4x49xf32, #tpu.memory_space<smem>>
    %cst_5 = arith.constant -3.520000e+00 : f32
    %31 = vector.broadcast %cst_5 : f32 to vector<2x128xf32>
    %32 = arith.maximumf %10, %31 : vector<2x128xf32>
    %33 = vector.broadcast %30 : f32 to vector<2x128xf32>
    %34 = arith.mulf %33, %32 : vector<2x128xf32>
    %35 = arith.addf %28, %34 : vector<2x128xf32>
    %36 = arith.index_cast %arg2 : i32 to index
    %c3 = arith.constant 3 : index
    %37 = memref.load %arg5[%36, %c3] : memref<4x49xf32, #tpu.memory_space<smem>>
    %cst_6 = arith.constant -3.360000e+00 : f32
    %38 = vector.broadcast %cst_6 : f32 to vector<2x128xf32>
    %39 = arith.maximumf %10, %38 : vector<2x128xf32>
    %40 = vector.broadcast %37 : f32 to vector<2x128xf32>
    %41 = arith.mulf %40, %39 : vector<2x128xf32>
    %42 = arith.addf %35, %41 : vector<2x128xf32>
    %43 = arith.index_cast %arg2 : i32 to index
    %c4 = arith.constant 4 : index
    %44 = memref.load %arg5[%43, %c4] : memref<4x49xf32, #tpu.memory_space<smem>>
    %cst_7 = arith.constant -3.200000e+00 : f32
    %45 = vector.broadcast %cst_7 : f32 to vector<2x128xf32>
    %46 = arith.maximumf %10, %45 : vector<2x128xf32>
    %47 = vector.broadcast %44 : f32 to vector<2x128xf32>
    %48 = arith.mulf %47, %46 : vector<2x128xf32>
    %49 = arith.addf %42, %48 : vector<2x128xf32>
    %50 = arith.index_cast %arg2 : i32 to index
    %c5 = arith.constant 5 : index
    %51 = memref.load %arg5[%50, %c5] : memref<4x49xf32, #tpu.memory_space<smem>>
    %cst_8 = arith.constant -3.040000e+00 : f32
    %52 = vector.broadcast %cst_8 : f32 to vector<2x128xf32>
    %53 = arith.maximumf %10, %52 : vector<2x128xf32>
    %54 = vector.broadcast %51 : f32 to vector<2x128xf32>
    %55 = arith.mulf %54, %53 : vector<2x128xf32>
    %56 = arith.addf %49, %55 : vector<2x128xf32>
    %57 = arith.index_cast %arg2 : i32 to index
    %c6 = arith.constant 6 : index
    %58 = memref.load %arg5[%57, %c6] : memref<4x49xf32, #tpu.memory_space<smem>>
    %cst_9 = arith.constant -2.880000e+00 : f32
    %59 = vector.broadcast %cst_9 : f32 to vector<2x128xf32>
    %60 = arith.maximumf %10, %59 : vector<2x128xf32>
    %61 = vector.broadcast %58 : f32 to vector<2x128xf32>
    %62 = arith.mulf %61, %60 : vector<2x128xf32>
    %63 = arith.addf %56, %62 : vector<2x128xf32>
    %64 = arith.index_cast %arg2 : i32 to index
    %c7 = arith.constant 7 : index
    %65 = memref.load %arg5[%64, %c7] : memref<4x49xf32, #tpu.memory_space<smem>>
    %cst_10 = arith.constant -2.720000e+00 : f32
    %66 = vector.broadcast %cst_10 : f32 to vector<2x128xf32>
    %67 = arith.maximumf %10, %66 : vector<2x128xf32>
    %68 = vector.broadcast %65 : f32 to vector<2x128xf32>
    %69 = arith.mulf %68, %67 : vector<2x128xf32>
    %70 = arith.addf %63, %69 : vector<2x128xf32>
    %71 = arith.index_cast %arg2 : i32 to index
    %c8 = arith.constant 8 : index
    %72 = memref.load %arg5[%71, %c8] : memref<4x49xf32, #tpu.memory_space<smem>>
    %cst_11 = arith.constant -2.560000e+00 : f32
    %73 = vector.broadcast %cst_11 : f32 to vector<2x128xf32>
    %74 = arith.maximumf %10, %73 : vector<2x128xf32>
    %75 = vector.broadcast %72 : f32 to vector<2x128xf32>
    %76 = arith.mulf %75, %74 : vector<2x128xf32>
    %77 = arith.addf %70, %76 : vector<2x128xf32>
    %78 = arith.index_cast %arg2 : i32 to index
    %c9 = arith.constant 9 : index
    %79 = memref.load %arg5[%78, %c9] : memref<4x49xf32, #tpu.memory_space<smem>>
    %cst_12 = arith.constant -2.400000e+00 : f32
    %80 = vector.broadcast %cst_12 : f32 to vector<2x128xf32>
    %81 = arith.maximumf %10, %80 : vector<2x128xf32>
    %82 = vector.broadcast %79 : f32 to vector<2x128xf32>
    %83 = arith.mulf %82, %81 : vector<2x128xf32>
    %84 = arith.addf %77, %83 : vector<2x128xf32>
    %85 = arith.index_cast %arg2 : i32 to index
    %c10 = arith.constant 10 : index
    %86 = memref.load %arg5[%85, %c10] : memref<4x49xf32, #tpu.memory_space<smem>>
    %cst_13 = arith.constant -2.240000e+00 : f32
    %87 = vector.broadcast %cst_13 : f32 to vector<2x128xf32>
    %88 = arith.maximumf %10, %87 : vector<2x128xf32>
    %89 = vector.broadcast %86 : f32 to vector<2x128xf32>
    %90 = arith.mulf %89, %88 : vector<2x128xf32>
    %91 = arith.addf %84, %90 : vector<2x128xf32>
    %92 = arith.index_cast %arg2 : i32 to index
    %c11 = arith.constant 11 : index
    %93 = memref.load %arg5[%92, %c11] : memref<4x49xf32, #tpu.memory_space<smem>>
    %cst_14 = arith.constant -2.080000e+00 : f32
    %94 = vector.broadcast %cst_14 : f32 to vector<2x128xf32>
    %95 = arith.maximumf %10, %94 : vector<2x128xf32>
    %96 = vector.broadcast %93 : f32 to vector<2x128xf32>
    %97 = arith.mulf %96, %95 : vector<2x128xf32>
    %98 = arith.addf %91, %97 : vector<2x128xf32>
    %99 = arith.index_cast %arg2 : i32 to index
    %c12 = arith.constant 12 : index
    %100 = memref.load %arg5[%99, %c12] : memref<4x49xf32, #tpu.memory_space<smem>>
    %cst_15 = arith.constant -1.920000e+00 : f32
    %101 = vector.broadcast %cst_15 : f32 to vector<2x128xf32>
    %102 = arith.maximumf %10, %101 : vector<2x128xf32>
    %103 = vector.broadcast %100 : f32 to vector<2x128xf32>
    %104 = arith.mulf %103, %102 : vector<2x128xf32>
    %105 = arith.addf %98, %104 : vector<2x128xf32>
    %106 = arith.index_cast %arg2 : i32 to index
    %c13 = arith.constant 13 : index
    %107 = memref.load %arg5[%106, %c13] : memref<4x49xf32, #tpu.memory_space<smem>>
    %cst_16 = arith.constant -1.760000e+00 : f32
    %108 = vector.broadcast %cst_16 : f32 to vector<2x128xf32>
    %109 = arith.maximumf %10, %108 : vector<2x128xf32>
    %110 = vector.broadcast %107 : f32 to vector<2x128xf32>
    %111 = arith.mulf %110, %109 : vector<2x128xf32>
    %112 = arith.addf %105, %111 : vector<2x128xf32>
    %113 = arith.index_cast %arg2 : i32 to index
    %c14 = arith.constant 14 : index
    %114 = memref.load %arg5[%113, %c14] : memref<4x49xf32, #tpu.memory_space<smem>>
    %cst_17 = arith.constant -1.600000e+00 : f32
    %115 = vector.broadcast %cst_17 : f32 to vector<2x128xf32>
    %116 = arith.maximumf %10, %115 : vector<2x128xf32>
    %117 = vector.broadcast %114 : f32 to vector<2x128xf32>
    %118 = arith.mulf %117, %116 : vector<2x128xf32>
    %119 = arith.addf %112, %118 : vector<2x128xf32>
    %120 = arith.index_cast %arg2 : i32 to index
    %c15 = arith.constant 15 : index
    %121 = memref.load %arg5[%120, %c15] : memref<4x49xf32, #tpu.memory_space<smem>>
    %cst_18 = arith.constant -1.440000e+00 : f32
    %122 = vector.broadcast %cst_18 : f32 to vector<2x128xf32>
    %123 = arith.maximumf %10, %122 : vector<2x128xf32>
    %124 = vector.broadcast %121 : f32 to vector<2x128xf32>
    %125 = arith.mulf %124, %123 : vector<2x128xf32>
    %126 = arith.addf %119, %125 : vector<2x128xf32>
    %127 = arith.index_cast %arg2 : i32 to index
    %c16 = arith.constant 16 : index
    %128 = memref.load %arg5[%127, %c16] : memref<4x49xf32, #tpu.memory_space<smem>>
    %cst_19 = arith.constant -1.280000e+00 : f32
    %129 = vector.broadcast %cst_19 : f32 to vector<2x128xf32>
    %130 = arith.maximumf %10, %129 : vector<2x128xf32>
    %131 = vector.broadcast %128 : f32 to vector<2x128xf32>
    %132 = arith.mulf %131, %130 : vector<2x128xf32>
    %133 = arith.addf %126, %132 : vector<2x128xf32>
    %134 = arith.index_cast %arg2 : i32 to index
    %c17 = arith.constant 17 : index
    %135 = memref.load %arg5[%134, %c17] : memref<4x49xf32, #tpu.memory_space<smem>>
    %cst_20 = arith.constant -1.120000e+00 : f32
    %136 = vector.broadcast %cst_20 : f32 to vector<2x128xf32>
    %137 = arith.maximumf %10, %136 : vector<2x128xf32>
    %138 = vector.broadcast %135 : f32 to vector<2x128xf32>
    %139 = arith.mulf %138, %137 : vector<2x128xf32>
    %140 = arith.addf %133, %139 : vector<2x128xf32>
    %141 = arith.index_cast %arg2 : i32 to index
    %c18 = arith.constant 18 : index
    %142 = memref.load %arg5[%141, %c18] : memref<4x49xf32, #tpu.memory_space<smem>>
    %cst_21 = arith.constant -0.959999978 : f32
    %143 = vector.broadcast %cst_21 : f32 to vector<2x128xf32>
    %144 = arith.maximumf %10, %143 : vector<2x128xf32>
    %145 = vector.broadcast %142 : f32 to vector<2x128xf32>
    %146 = arith.mulf %145, %144 : vector<2x128xf32>
    %147 = arith.addf %140, %146 : vector<2x128xf32>
    %148 = arith.index_cast %arg2 : i32 to index
    %c19 = arith.constant 19 : index
    %149 = memref.load %arg5[%148, %c19] : memref<4x49xf32, #tpu.memory_space<smem>>
    %cst_22 = arith.constant -8.000000e-01 : f32
    %150 = vector.broadcast %cst_22 : f32 to vector<2x128xf32>
    %151 = arith.maximumf %10, %150 : vector<2x128xf32>
    %152 = vector.broadcast %149 : f32 to vector<2x128xf32>
    %153 = arith.mulf %152, %151 : vector<2x128xf32>
    %154 = arith.addf %147, %153 : vector<2x128xf32>
    %155 = arith.index_cast %arg2 : i32 to index
    %c20 = arith.constant 20 : index
    %156 = memref.load %arg5[%155, %c20] : memref<4x49xf32, #tpu.memory_space<smem>>
    %cst_23 = arith.constant -6.400000e-01 : f32
    %157 = vector.broadcast %cst_23 : f32 to vector<2x128xf32>
    %158 = arith.maximumf %10, %157 : vector<2x128xf32>
    %159 = vector.broadcast %156 : f32 to vector<2x128xf32>
    %160 = arith.mulf %159, %158 : vector<2x128xf32>
    %161 = arith.addf %154, %160 : vector<2x128xf32>
    %162 = arith.index_cast %arg2 : i32 to index
    %c21 = arith.constant 21 : index
    %163 = memref.load %arg5[%162, %c21] : memref<4x49xf32, #tpu.memory_space<smem>>
    %cst_24 = arith.constant -4.800000e-01 : f32
    %164 = vector.broadcast %cst_24 : f32 to vector<2x128xf32>
    %165 = arith.maximumf %10, %164 : vector<2x128xf32>
    %166 = vector.broadcast %163 : f32 to vector<2x128xf32>
    %167 = arith.mulf %166, %165 : vector<2x128xf32>
    %168 = arith.addf %161, %167 : vector<2x128xf32>
    %169 = arith.index_cast %arg2 : i32 to index
    %c22 = arith.constant 22 : index
    %170 = memref.load %arg5[%169, %c22] : memref<4x49xf32, #tpu.memory_space<smem>>
    %cst_25 = arith.constant -3.200000e-01 : f32
    %171 = vector.broadcast %cst_25 : f32 to vector<2x128xf32>
    %172 = arith.maximumf %10, %171 : vector<2x128xf32>
    %173 = vector.broadcast %170 : f32 to vector<2x128xf32>
    %174 = arith.mulf %173, %172 : vector<2x128xf32>
    %175 = arith.addf %168, %174 : vector<2x128xf32>
    %176 = arith.index_cast %arg2 : i32 to index
    %c23 = arith.constant 23 : index
    %177 = memref.load %arg5[%176, %c23] : memref<4x49xf32, #tpu.memory_space<smem>>
    %cst_26 = arith.constant -1.600000e-01 : f32
    %178 = vector.broadcast %cst_26 : f32 to vector<2x128xf32>
    %179 = arith.maximumf %10, %178 : vector<2x128xf32>
    %180 = vector.broadcast %177 : f32 to vector<2x128xf32>
    %181 = arith.mulf %180, %179 : vector<2x128xf32>
    %182 = arith.addf %175, %181 : vector<2x128xf32>
    %183 = arith.index_cast %arg2 : i32 to index
    %c24 = arith.constant 24 : index
    %184 = memref.load %arg5[%183, %c24] : memref<4x49xf32, #tpu.memory_space<smem>>
    %cst_27 = arith.constant 0.000000e+00 : f32
    %185 = vector.broadcast %cst_27 : f32 to vector<2x128xf32>
    %186 = arith.maximumf %10, %185 : vector<2x128xf32>
    %187 = vector.broadcast %184 : f32 to vector<2x128xf32>
    %188 = arith.mulf %187, %186 : vector<2x128xf32>
    %189 = arith.addf %182, %188 : vector<2x128xf32>
    %190 = arith.index_cast %arg2 : i32 to index
    %c25 = arith.constant 25 : index
    %191 = memref.load %arg5[%190, %c25] : memref<4x49xf32, #tpu.memory_space<smem>>
    %cst_28 = arith.constant 1.600000e-01 : f32
    %192 = vector.broadcast %cst_28 : f32 to vector<2x128xf32>
    %193 = arith.maximumf %10, %192 : vector<2x128xf32>
    %194 = vector.broadcast %191 : f32 to vector<2x128xf32>
    %195 = arith.mulf %194, %193 : vector<2x128xf32>
    %196 = arith.addf %189, %195 : vector<2x128xf32>
    %197 = arith.index_cast %arg2 : i32 to index
    %c26 = arith.constant 26 : index
    %198 = memref.load %arg5[%197, %c26] : memref<4x49xf32, #tpu.memory_space<smem>>
    %cst_29 = arith.constant 3.200000e-01 : f32
    %199 = vector.broadcast %cst_29 : f32 to vector<2x128xf32>
    %200 = arith.maximumf %10, %199 : vector<2x128xf32>
    %201 = vector.broadcast %198 : f32 to vector<2x128xf32>
    %202 = arith.mulf %201, %200 : vector<2x128xf32>
    %203 = arith.addf %196, %202 : vector<2x128xf32>
    %204 = arith.index_cast %arg2 : i32 to index
    %c27 = arith.constant 27 : index
    %205 = memref.load %arg5[%204, %c27] : memref<4x49xf32, #tpu.memory_space<smem>>
    %cst_30 = arith.constant 4.800000e-01 : f32
    %206 = vector.broadcast %cst_30 : f32 to vector<2x128xf32>
    %207 = arith.maximumf %10, %206 : vector<2x128xf32>
    %208 = vector.broadcast %205 : f32 to vector<2x128xf32>
    %209 = arith.mulf %208, %207 : vector<2x128xf32>
    %210 = arith.addf %203, %209 : vector<2x128xf32>
    %211 = arith.index_cast %arg2 : i32 to index
    %c28 = arith.constant 28 : index
    %212 = memref.load %arg5[%211, %c28] : memref<4x49xf32, #tpu.memory_space<smem>>
    %cst_31 = arith.constant 6.400000e-01 : f32
    %213 = vector.broadcast %cst_31 : f32 to vector<2x128xf32>
    %214 = arith.maximumf %10, %213 : vector<2x128xf32>
    %215 = vector.broadcast %212 : f32 to vector<2x128xf32>
    %216 = arith.mulf %215, %214 : vector<2x128xf32>
    %217 = arith.addf %210, %216 : vector<2x128xf32>
    %218 = arith.index_cast %arg2 : i32 to index
    %c29 = arith.constant 29 : index
    %219 = memref.load %arg5[%218, %c29] : memref<4x49xf32, #tpu.memory_space<smem>>
    %cst_32 = arith.constant 8.000000e-01 : f32
    %220 = vector.broadcast %cst_32 : f32 to vector<2x128xf32>
    %221 = arith.maximumf %10, %220 : vector<2x128xf32>
    %222 = vector.broadcast %219 : f32 to vector<2x128xf32>
    %223 = arith.mulf %222, %221 : vector<2x128xf32>
    %224 = arith.addf %217, %223 : vector<2x128xf32>
    %225 = arith.index_cast %arg2 : i32 to index
    %c30 = arith.constant 30 : index
    %226 = memref.load %arg5[%225, %c30] : memref<4x49xf32, #tpu.memory_space<smem>>
    %cst_33 = arith.constant 0.959999978 : f32
    %227 = vector.broadcast %cst_33 : f32 to vector<2x128xf32>
    %228 = arith.maximumf %10, %227 : vector<2x128xf32>
    %229 = vector.broadcast %226 : f32 to vector<2x128xf32>
    %230 = arith.mulf %229, %228 : vector<2x128xf32>
    %231 = arith.addf %224, %230 : vector<2x128xf32>
    %232 = arith.index_cast %arg2 : i32 to index
    %c31 = arith.constant 31 : index
    %233 = memref.load %arg5[%232, %c31] : memref<4x49xf32, #tpu.memory_space<smem>>
    %cst_34 = arith.constant 1.120000e+00 : f32
    %234 = vector.broadcast %cst_34 : f32 to vector<2x128xf32>
    %235 = arith.maximumf %10, %234 : vector<2x128xf32>
    %236 = vector.broadcast %233 : f32 to vector<2x128xf32>
    %237 = arith.mulf %236, %235 : vector<2x128xf32>
    %238 = arith.addf %231, %237 : vector<2x128xf32>
    %239 = arith.index_cast %arg2 : i32 to index
    %c32 = arith.constant 32 : index
    %240 = memref.load %arg5[%239, %c32] : memref<4x49xf32, #tpu.memory_space<smem>>
    %cst_35 = arith.constant 1.280000e+00 : f32
    %241 = vector.broadcast %cst_35 : f32 to vector<2x128xf32>
    %242 = arith.maximumf %10, %241 : vector<2x128xf32>
    %243 = vector.broadcast %240 : f32 to vector<2x128xf32>
    %244 = arith.mulf %243, %242 : vector<2x128xf32>
    %245 = arith.addf %238, %244 : vector<2x128xf32>
    %246 = arith.index_cast %arg2 : i32 to index
    %c33 = arith.constant 33 : index
    %247 = memref.load %arg5[%246, %c33] : memref<4x49xf32, #tpu.memory_space<smem>>
    %cst_36 = arith.constant 1.440000e+00 : f32
    %248 = vector.broadcast %cst_36 : f32 to vector<2x128xf32>
    %249 = arith.maximumf %10, %248 : vector<2x128xf32>
    %250 = vector.broadcast %247 : f32 to vector<2x128xf32>
    %251 = arith.mulf %250, %249 : vector<2x128xf32>
    %252 = arith.addf %245, %251 : vector<2x128xf32>
    %253 = arith.index_cast %arg2 : i32 to index
    %c34 = arith.constant 34 : index
    %254 = memref.load %arg5[%253, %c34] : memref<4x49xf32, #tpu.memory_space<smem>>
    %cst_37 = arith.constant 1.600000e+00 : f32
    %255 = vector.broadcast %cst_37 : f32 to vector<2x128xf32>
    %256 = arith.maximumf %10, %255 : vector<2x128xf32>
    %257 = vector.broadcast %254 : f32 to vector<2x128xf32>
    %258 = arith.mulf %257, %256 : vector<2x128xf32>
    %259 = arith.addf %252, %258 : vector<2x128xf32>
    %260 = arith.index_cast %arg2 : i32 to index
    %c35 = arith.constant 35 : index
    %261 = memref.load %arg5[%260, %c35] : memref<4x49xf32, #tpu.memory_space<smem>>
    %cst_38 = arith.constant 1.760000e+00 : f32
    %262 = vector.broadcast %cst_38 : f32 to vector<2x128xf32>
    %263 = arith.maximumf %10, %262 : vector<2x128xf32>
    %264 = vector.broadcast %261 : f32 to vector<2x128xf32>
    %265 = arith.mulf %264, %263 : vector<2x128xf32>
    %266 = arith.addf %259, %265 : vector<2x128xf32>
    %267 = arith.index_cast %arg2 : i32 to index
    %c36 = arith.constant 36 : index
    %268 = memref.load %arg5[%267, %c36] : memref<4x49xf32, #tpu.memory_space<smem>>
    %cst_39 = arith.constant 1.920000e+00 : f32
    %269 = vector.broadcast %cst_39 : f32 to vector<2x128xf32>
    %270 = arith.maximumf %10, %269 : vector<2x128xf32>
    %271 = vector.broadcast %268 : f32 to vector<2x128xf32>
    %272 = arith.mulf %271, %270 : vector<2x128xf32>
    %273 = arith.addf %266, %272 : vector<2x128xf32>
    %274 = arith.index_cast %arg2 : i32 to index
    %c37 = arith.constant 37 : index
    %275 = memref.load %arg5[%274, %c37] : memref<4x49xf32, #tpu.memory_space<smem>>
    %cst_40 = arith.constant 2.080000e+00 : f32
    %276 = vector.broadcast %cst_40 : f32 to vector<2x128xf32>
    %277 = arith.maximumf %10, %276 : vector<2x128xf32>
    %278 = vector.broadcast %275 : f32 to vector<2x128xf32>
    %279 = arith.mulf %278, %277 : vector<2x128xf32>
    %280 = arith.addf %273, %279 : vector<2x128xf32>
    %281 = arith.index_cast %arg2 : i32 to index
    %c38 = arith.constant 38 : index
    %282 = memref.load %arg5[%281, %c38] : memref<4x49xf32, #tpu.memory_space<smem>>
    %cst_41 = arith.constant 2.240000e+00 : f32
    %283 = vector.broadcast %cst_41 : f32 to vector<2x128xf32>
    %284 = arith.maximumf %10, %283 : vector<2x128xf32>
    %285 = vector.broadcast %282 : f32 to vector<2x128xf32>
    %286 = arith.mulf %285, %284 : vector<2x128xf32>
    %287 = arith.addf %280, %286 : vector<2x128xf32>
    %288 = arith.index_cast %arg2 : i32 to index
    %c39 = arith.constant 39 : index
    %289 = memref.load %arg5[%288, %c39] : memref<4x49xf32, #tpu.memory_space<smem>>
    %cst_42 = arith.constant 2.400000e+00 : f32
    %290 = vector.broadcast %cst_42 : f32 to vector<2x128xf32>
    %291 = arith.maximumf %10, %290 : vector<2x128xf32>
    %292 = vector.broadcast %289 : f32 to vector<2x128xf32>
    %293 = arith.mulf %292, %291 : vector<2x128xf32>
    %294 = arith.addf %287, %293 : vector<2x128xf32>
    %295 = arith.index_cast %arg2 : i32 to index
    %c40 = arith.constant 40 : index
    %296 = memref.load %arg5[%295, %c40] : memref<4x49xf32, #tpu.memory_space<smem>>
    %cst_43 = arith.constant 2.560000e+00 : f32
    %297 = vector.broadcast %cst_43 : f32 to vector<2x128xf32>
    %298 = arith.maximumf %10, %297 : vector<2x128xf32>
    %299 = vector.broadcast %296 : f32 to vector<2x128xf32>
    %300 = arith.mulf %299, %298 : vector<2x128xf32>
    %301 = arith.addf %294, %300 : vector<2x128xf32>
    %302 = arith.index_cast %arg2 : i32 to index
    %c41 = arith.constant 41 : index
    %303 = memref.load %arg5[%302, %c41] : memref<4x49xf32, #tpu.memory_space<smem>>
    %cst_44 = arith.constant 2.720000e+00 : f32
    %304 = vector.broadcast %cst_44 : f32 to vector<2x128xf32>
    %305 = arith.maximumf %10, %304 : vector<2x128xf32>
    %306 = vector.broadcast %303 : f32 to vector<2x128xf32>
    %307 = arith.mulf %306, %305 : vector<2x128xf32>
    %308 = arith.addf %301, %307 : vector<2x128xf32>
    %309 = arith.index_cast %arg2 : i32 to index
    %c42 = arith.constant 42 : index
    %310 = memref.load %arg5[%309, %c42] : memref<4x49xf32, #tpu.memory_space<smem>>
    %cst_45 = arith.constant 2.880000e+00 : f32
    %311 = vector.broadcast %cst_45 : f32 to vector<2x128xf32>
    %312 = arith.maximumf %10, %311 : vector<2x128xf32>
    %313 = vector.broadcast %310 : f32 to vector<2x128xf32>
    %314 = arith.mulf %313, %312 : vector<2x128xf32>
    %315 = arith.addf %308, %314 : vector<2x128xf32>
    %316 = arith.index_cast %arg2 : i32 to index
    %c43 = arith.constant 43 : index
    %317 = memref.load %arg5[%316, %c43] : memref<4x49xf32, #tpu.memory_space<smem>>
    %cst_46 = arith.constant 3.040000e+00 : f32
    %318 = vector.broadcast %cst_46 : f32 to vector<2x128xf32>
    %319 = arith.maximumf %10, %318 : vector<2x128xf32>
    %320 = vector.broadcast %317 : f32 to vector<2x128xf32>
    %321 = arith.mulf %320, %319 : vector<2x128xf32>
    %322 = arith.addf %315, %321 : vector<2x128xf32>
    %323 = arith.index_cast %arg2 : i32 to index
    %c44 = arith.constant 44 : index
    %324 = memref.load %arg5[%323, %c44] : memref<4x49xf32, #tpu.memory_space<smem>>
    %cst_47 = arith.constant 3.200000e+00 : f32
    %325 = vector.broadcast %cst_47 : f32 to vector<2x128xf32>
    %326 = arith.maximumf %10, %325 : vector<2x128xf32>
    %327 = vector.broadcast %324 : f32 to vector<2x128xf32>
    %328 = arith.mulf %327, %326 : vector<2x128xf32>
    %329 = arith.addf %322, %328 : vector<2x128xf32>
    %330 = arith.index_cast %arg2 : i32 to index
    %c45 = arith.constant 45 : index
    %331 = memref.load %arg5[%330, %c45] : memref<4x49xf32, #tpu.memory_space<smem>>
    %cst_48 = arith.constant 3.360000e+00 : f32
    %332 = vector.broadcast %cst_48 : f32 to vector<2x128xf32>
    %333 = arith.maximumf %10, %332 : vector<2x128xf32>
    %334 = vector.broadcast %331 : f32 to vector<2x128xf32>
    %335 = arith.mulf %334, %333 : vector<2x128xf32>
    %336 = arith.addf %329, %335 : vector<2x128xf32>
    %337 = arith.index_cast %arg2 : i32 to index
    %c46 = arith.constant 46 : index
    %338 = memref.load %arg5[%337, %c46] : memref<4x49xf32, #tpu.memory_space<smem>>
    %cst_49 = arith.constant 3.520000e+00 : f32
    %339 = vector.broadcast %cst_49 : f32 to vector<2x128xf32>
    %340 = arith.maximumf %10, %339 : vector<2x128xf32>
    %341 = vector.broadcast %338 : f32 to vector<2x128xf32>
    %342 = arith.mulf %341, %340 : vector<2x128xf32>
    %343 = arith.addf %336, %342 : vector<2x128xf32>
    %344 = arith.index_cast %arg2 : i32 to index
    %c47 = arith.constant 47 : index
    %345 = memref.load %arg5[%344, %c47] : memref<4x49xf32, #tpu.memory_space<smem>>
    %cst_50 = arith.constant 3.680000e+00 : f32
    %346 = vector.broadcast %cst_50 : f32 to vector<2x128xf32>
    %347 = arith.maximumf %10, %346 : vector<2x128xf32>
    %348 = vector.broadcast %345 : f32 to vector<2x128xf32>
    %349 = arith.mulf %348, %347 : vector<2x128xf32>
    %350 = arith.addf %343, %349 : vector<2x128xf32>
    %351 = arith.index_cast %arg2 : i32 to index
    %c48 = arith.constant 48 : index
    %352 = memref.load %arg5[%351, %c48] : memref<4x49xf32, #tpu.memory_space<smem>>
    %cst_51 = arith.constant 3.840000e+00 : f32
    %353 = vector.broadcast %cst_51 : f32 to vector<2x128xf32>
    %354 = arith.maximumf %10, %353 : vector<2x128xf32>
    %355 = vector.broadcast %352 : f32 to vector<2x128xf32>
    %356 = arith.mulf %355, %354 : vector<2x128xf32>
    %357 = arith.addf %350, %356 : vector<2x128xf32>
    %c0_52 = arith.constant 0 : index
    %c0_53 = arith.constant 0 : index
    %358 = arith.index_cast %7 : i32 to index
    %c0_54 = arith.constant 0 : index
    %359 = vector.load %arg7[%c0_52, %c0_53, %358, %c0_54] : memref<1x1x2x128xf32, #tpu.memory_space<vmem>>, vector<1x1x2x128xf32>
    %360 = vector.shape_cast %359 : vector<1x1x2x128xf32> to vector<2x128xf32>
    %361 = vector.shape_cast %357 : vector<2x128xf32> to vector<1x1x2x128xf32>
    tpu.vector_store %arg7[%c0_52, %c0_53, %358, %c0_54], %361 {strides = array<i32>} : memref<1x1x2x128xf32, #tpu.memory_space<vmem>>, vector<1x1x2x128xf32>,
    %c1_i32_55 = arith.constant 1 : i32
    return
  }
  func.func @transform_0(%arg0: i32, %arg1: i32, %arg2: i32) -> i32 {
    %c0_i32 = arith.constant 0 : i32
    %c0_i32_0 = arith.constant 0 : i32
    return %c0_i32 : i32
  }
  func.func @transform_1(%arg0: i32, %arg1: i32, %arg2: i32) -> i32 {
    %c0_i32 = arith.constant 0 : i32
    %c0_i32_0 = arith.constant 0 : i32
    return %c0_i32 : i32
  }
  func.func @transform_2(%arg0: i32, %arg1: i32, %arg2: i32) -> (i32, i32) {
    %c0_i32 = arith.constant 0 : i32
    %c0_i32_0 = arith.constant 0 : i32
    %c0_i32_1 = arith.constant 0 : i32
    return %c0_i32, %c0_i32_0 : i32, i32
  }
  func.func @transform_3(%arg0: i32, %arg1: i32, %arg2: i32) -> (i32, i32, i32, i32) {
    %c0_i32 = arith.constant 0 : i32
    %c0_i32_0 = arith.constant 0 : i32
    return %arg1, %arg2, %arg0, %c0_i32 : i32, i32, i32, i32
  }
  func.func @transform_4(%arg0: i32, %arg1: i32, %arg2: i32) -> (i32, i32, i32, i32) {
    %c0_i32 = arith.constant 0 : i32
    %c0_i32_0 = arith.constant 0 : i32
    return %arg1, %arg2, %arg0, %c0_i32 : i32, i32, i32, i32
  }
}

</mosaic_0001>

<llo_original>
// kernel: tpu_custom_call.1
$region0: #{tpu_custom_call.1}
  #allocation0 [shape = 'u32[]', space=smem, size = 0x4, offset = 0x4, fixed_abs, tag = 'smem constant byte address 0x4 - core index']
  #allocation1 [shape = 'u32[144,128]{1,0:T(1,128)}', space=vmem, size = 0x12000, scoped, tag = 'internal scratch']
  %s0 = inlined_call_operand.hbm [shape: f32[4], index: 0, kind: input, shape index: {}]
  %s1 = inlined_call_operand.vmem [shape: f32[4], index: 1, kind: input, shape index: {}]
  %s2 = inlined_call_operand.vmem [shape: f32[4,49], index: 2, kind: input, shape index: {}]
  %s3 = inlined_call_operand.hbm [shape: f32[2,4,2,128], index: 3, kind: input, shape index: {}]
  %s4 = inlined_call_operand.hbm [shape: f32[2,4,2,128], index: 4, kind: output, shape index: {}]
  %s5 = sld [smem:[#allocation0]]
  $region65: #{tpu_custom_call.1} parent=0
    _
  %s7 = ssub.s32 1, %s5
  %s8 = scalar_select 0, %s7, %s5
  $region1: #{tpu_custom_call.1} parent=0
    #allocation2 [shape = 'u8[512]{0}', space=smem, size = 0x200, scoped, tag = 'input window, operand 0, single buffered']
    #allocation3 [shape = 's32[2]{0}', space=sflag, size = 0x8, scoped, tag = 'scoped memory for tpu_custom_call.1']
    #allocation4 [shape = 's32[2]{0}', space=sflag, size = 0x8, scoped, tag = 'scoped memory for tpu_custom_call.1']
    #allocation5 [shape = 's32[2]{0}', space=sflag, size = 0x8, scoped, tag = 'scoped memory for tpu_custom_call.1']
    #allocation6 [shape = 's32[2]{0}', space=sflag, size = 0x8, scoped, tag = 'scoped memory for tpu_custom_call.1']
    #allocation7 [shape = 'u8[512]{0}', space=smem, size = 0x200, scoped, tag = 'input window, operand 1, single buffered']
    #allocation8 [shape = 'u8[2048]{0}', space=smem, size = 0x800, scoped, tag = 'input window, operand 2, single buffered']
    #allocation9 [shape = 's32[1]{0}', space=sflag, size = 0x4, scoped, tag = 'scoped memory for tpu_custom_call.1']
    #allocation10 [shape = 'u8[2048]{0}', space=vmem, size = 0x800, scoped, tag = 'input window, operand 3']
    #allocation11 [shape = 'u8[2048]{0}', space=vmem, size = 0x800, scoped, tag = 'output window, operand 0']
    %9 = vsyncpa [#allocation5], 0
    %10 = vsyncpa [#allocation6], 0
    %11 = vsyncpa [#allocation9], 0
    %12 = vsyncpa [#allocation3], 0
    %s13 = scalar_lea.sflag [#allocation3], 1
    %14 = vsyncpa %s13, 0
    %15 = vsyncpa [#allocation4], 0
    %s16 = scalar_lea.sflag [#allocation4], 1
    %17 = vsyncpa %s16, 0
    loop: start=0, step=1, limit=10
    $region2: #{tpu_custom_call.1} parent=1 // loop_pre_header
      _
    $region3: #{tpu_custom_call.1} parent=1 // loop_header
      %s19 = sphi 0, %s23
      %p20 = scmp.ge.s32.totalorder %s19, 10
      %s26 = sphi 0, %s45
      %s27 = sphi 0, %s41
      %s28 = sphi 0, %s37
      %s29 = sphi 0, %s26
      %s30 = sphi 0, %s27
      %s31 = sphi 0, %s28
      %s32 = sphi 0, %s29
      %s33 = sphi 0, %s30
      %s34 = sphi 0, %s31
      %s46 = sphi 0, %s46
      %s48 = sphi 0, %s46
      %s49 = sphi 0, %s48
      %s63 = sphi 0, %s49
      %s67 = sphi 0, %s67
      %s69 = sphi 0, %s67
      %s70 = sphi 0, %s69
      %s84 = sphi 0, %s70
      %s88 = sphi 0, %s88
      %s90 = sphi 0, %s88
      %s91 = sphi 0, %s90
      %s105 = sphi 0, %s91
      %s115 = sphi 0, %s117
      %s118 = sphi 0, %s115
      %s119 = sphi 0, %s118
      %s135 = sphi 0, %s119
      %s145 = sphi 0, %s147
      %s148 = sphi 0, %s145
      %s149 = sphi 0, %s148
      %s165 = sphi 0, %s149
    $region4: #{tpu_custom_call.1} parent=1 // loop_header_branch
      %22 = sbr.rel (%p20) target = $region8
    $region5: #{tpu_custom_call.1} parent=1 // loop_body
      %s24 = ssub.s32 %s19, 1
      %s25 = ssub.s32 %s19, 2
      %s35 = sadd.s32 1, %s28
      %p36 = scmp.ge.s32.totalorder %s35, 4
      %s37 = scalar_select %p36, 0, %s35
      %s38 = sadd.s32 1, %s27
      %s39 = scalar_select %p36, %s38, %s27
      %p40 = scmp.ge.s32.totalorder %s39, 2
      %s41 = scalar_select %p40, 0, %s39
      %s42 = sadd.s32 1, %s26
      %s43 = scalar_select %p40, %s42, %s26
      %p44 = scmp.ge.s32.totalorder %s43, 1
      %s45 = scalar_select %p44, 0, %s43
      %s47 = sadd.s32 %s46, 1
      %p50 = scmp.eq.s32.totalorder %s19, 7
      %p51 = scmp.ne.s32.totalorder %s46, %s48
      %p52 = scmp.eq.s32.totalorder %s19, 0
      %p53 = por %p51, %p52
      %p54 = scmp.ne.s32.totalorder %s46, %s48
      %p55 = scmp.eq.s32.totalorder %s24, 7
      %p56 = por %p54, %p55
      %p57 = scmp.ne.s32.totalorder %s48, %s49
      %p58 = scmp.eq.s32.totalorder %s24, 0
      %p59 = por %p57, %p58
      %p60 = scmp.ne.s32.totalorder %s48, %s49
      %p61 = scmp.eq.s32.totalorder %s25, 7
      %p62 = por %p60, %p61
      %p64 = scmp.ne.s32.totalorder %s49, %s63
      %p65 = scmp.eq.s32.totalorder %s25, 0
      %p66 = por %p64, %p65
      %s68 = sadd.s32 %s67, 1
      %p71 = scmp.eq.s32.totalorder %s19, 7
      %p72 = scmp.ne.s32.totalorder %s67, %s69
      %p73 = scmp.eq.s32.totalorder %s19, 0
      %p74 = por %p72, %p73
      %p75 = scmp.ne.s32.totalorder %s67, %s69
      %p76 = scmp.eq.s32.totalorder %s24, 7
      %p77 = por %p75, %p76
      %p78 = scmp.ne.s32.totalorder %s69, %s70
      %p79 = scmp.eq.s32.totalorder %s24, 0
      %p80 = por %p78, %p79
      %p81 = scmp.ne.s32.totalorder %s69, %s70
      %p82 = scmp.eq.s32.totalorder %s25, 7
      %p83 = por %p81, %p82
      %p85 = scmp.ne.s32.totalorder %s70, %s84
      %p86 = scmp.eq.s32.totalorder %s25, 0
      %p87 = por %p85, %p86
      %s89 = sadd.s32 %s88, 1
      %p92 = scmp.eq.s32.totalorder %s19, 7
      %p93 = scmp.ne.s32.totalorder %s88, %s90
      %p94 = scmp.eq.s32.totalorder %s19, 0
      %p95 = por %p93, %p94
      %p96 = scmp.ne.s32.totalorder %s88, %s90
      %p97 = scmp.eq.s32.totalorder %s24, 7
      %p98 = por %p96, %p97
      %p99 = scmp.ne.s32.totalorder %s90, %s91
      %p100 = scmp.eq.s32.totalorder %s24, 0
      %p101 = por %p99, %p100
      %p102 = scmp.ne.s32.totalorder %s90, %s91
      %p103 = scmp.eq.s32.totalorder %s25, 7
      %p104 = por %p102, %p103
      %p106 = scmp.ne.s32.totalorder %s91, %s105
      %p107 = scmp.eq.s32.totalorder %s25, 0
      %p108 = por %p106, %p107
      %s109 = ssub.s32 %s27, %s41
      %s110 = ssub.s32 %s28, %s37
      %s111 = sor.u32 %s109, %s110
      %s112 = ssub.s32 %s26, %s45
      %s113 = sor.u32 %s111, %s112
      %p114 = scmp.eq.s32.totalorder %s113, 0
      %s116 = sadd.s32 %s115, 1
      %s117 = scalar_select %p114, %s115, %s116
      %p120 = pneg %p114
      %p121 = scmp.eq.s32.totalorder %s19, 7
      %p122 = por %p120, %p121
      %p123 = scmp.ne.s32.totalorder %s115, %s118
      %p124 = scmp.eq.s32.totalorder %s19, 0
      %p125 = por %p123, %p124
      %p126 = scmp.ne.s32.totalorder %s115, %s118
      %p127 = scmp.eq.s32.totalorder %s24, 7
      %p128 = por %p126, %p127
      %p129 = scmp.ne.s32.totalorder %s118, %s119
      %p130 = scmp.eq.s32.totalorder %s24, 0
      %p131 = por %p129, %p130
      %p132 = scmp.ne.s32.totalorder %s118, %s119
      %p133 = scmp.eq.s32.totalorder %s25, 7
      %p134 = por %p132, %p133
      %p136 = scmp.ne.s32.totalorder %s119, %s135
      %p137 = scmp.eq.s32.totalorder %s25, 0
      %p138 = por %p136, %p137
      %s139 = ssub.s32 %s27, %s41
      %s140 = ssub.s32 %s28, %s37
      %s141 = sor.u32 %s139, %s140
      %s142 = ssub.s32 %s26, %s45
      %s143 = sor.u32 %s141, %s142
      %p144 = scmp.eq.s32.totalorder %s143, 0
      %s146 = sadd.s32 %s145, 1
      %s147 = scalar_select %p144, %s145, %s146
      %p150 = pneg %p144
      %p151 = scmp.eq.s32.totalorder %s19, 7
      %p152 = por %p150, %p151
      %p153 = scmp.ne.s32.totalorder %s145, %s148
      %p154 = scmp.eq.s32.totalorder %s19, 0
      %p155 = por %p153, %p154
      %p156 = scmp.ne.s32.totalorder %s145, %s148
      %p157 = scmp.eq.s32.totalorder %s24, 7
      %p158 = por %p156, %p157
      %p159 = scmp.ne.s32.totalorder %s148, %s149
      %p160 = scmp.eq.s32.totalorder %s24, 0
      %p161 = por %p159, %p160
      %p162 = scmp.ne.s32.totalorder %s148, %s149
      %p163 = scmp.eq.s32.totalorder %s25, 7
      %p164 = por %p162, %p163
      %p166 = scmp.ne.s32.totalorder %s149, %s165
      %p167 = scmp.eq.s32.totalorder %s25, 0
      %p168 = por %p166, %p167
      %p169 = scmp.le.s32.totalorder 1, %s19
      %p170 = scmp.lt.s32.totalorder %s19, 9
      %p171 = pnand %p169, %p170
      %p172 = pneg %p171
      // Predicated region
      $region9: #{tpu_custom_call.1} parent=5 // pred_check
        _
      $region10: #{tpu_custom_call.1} parent=5 // pred_check_branch
        %174 = sbr.rel (%p171) target = $region12
      $region11: #{tpu_custom_call.1} parent=5 // pred_region
        %s175 = ssub.s32 %s19, 1
        // Predicated region
        $region13: #{tpu_custom_call.1} parent=11 // pred_check
          %p176 = pneg %p59
        $region14: #{tpu_custom_call.1} parent=11 // pred_check_branch
          %178 = sbr.rel (%p176) target = $region16
        $region15: #{tpu_custom_call.1} parent=11 // pred_region
          %s180 = ssub.s32 16, 16
          %181 = vsyncadd [#allocation5], %s180
          %184 = dma.hbm_to_smem %s0, 16, [#allocation2], [#allocation5]
        $region16: #{tpu_custom_call.1} parent=11 // pred_fallthru
          _
        // Predicated region
        $region17: #{tpu_custom_call.1} parent=11 // pred_check
          %p185 = pneg %p80
        $region18: #{tpu_custom_call.1} parent=11 // pred_check_branch
          %187 = sbr.rel (%p185) target = $region20
        $region19: #{tpu_custom_call.1} parent=11 // pred_region
          %s189 = ssub.s32 16, 16
          %190 = vsyncadd [#allocation6], %s189
          %s192 = sshll.u32 %s1, 4
          %s193 = int_to_ptr.vmem [resolvable:$true] %s192
          %195 = dma.vmem_to_smem %s193, 16, [#allocation7], [#allocation6]
        $region20: #{tpu_custom_call.1} parent=11 // pred_fallthru
          _
        // Predicated region
        $region21: #{tpu_custom_call.1} parent=11 // pred_check
          %p196 = pneg %p101
        $region22: #{tpu_custom_call.1} parent=11 // pred_check_branch
          %198 = sbr.rel (%p196) target = $region24
        $region23: #{tpu_custom_call.1} parent=11 // pred_region
          %s200 = ssub.s32 64, 64
          %201 = vsyncadd [#allocation9], %s200
          %s203 = sshll.u32 %s2, 4
          %s204 = int_to_ptr.vmem [resolvable:$true] %s203
          %206 = dma.vmem_to_smem %s204, 64, [#allocation8], [#allocation9]
        $region24: #{tpu_custom_call.1} parent=11 // pred_fallthru
          _
      $region12: #{tpu_custom_call.1} parent=5 // pred_fallthru
        _
      %p207 = scmp.lt.s32.totalorder %s19, 8
      // Predicated region
      $region25: #{tpu_custom_call.1} parent=5 // pred_check
        %p208 = pneg %p207
      $region26: #{tpu_custom_call.1} parent=5 // pred_check_branch
        %210 = sbr.rel (%p208) target = $region28
      $region27: #{tpu_custom_call.1} parent=5 // pred_region
        // Predicated region
        $region29: #{tpu_custom_call.1} parent=27 // pred_check
          %p211 = pneg %p125
        $region30: #{tpu_custom_call.1} parent=27 // pred_check_branch
          %213 = sbr.rel (%p211) target = $region32
        $region31: #{tpu_custom_call.1} parent=27 // pred_region
          %s214 = sand.u32 %s115, 1
          %s215 = scalar_lea.sflag [#allocation3], %s214
          %s216 = sand.u32 %s115, 1
          %s217 = smul.addr %s216, 2
          %s218 = scalar_lea.vmem [#allocation10], %s217
          %s220 = ssub.s32 32, 32
          %221 = vsyncadd %s215, %s220
          %s222 = sadd.s32 %s26, %s28
          %s223 = smul.addr %s27, 4
          %s224 = sadd.s32 %s222, %s223
          %s225 = smul.addr %s224, 32
          %s226 = scalar_lea.hbm %s3, %s225
          %s228 = sshll.u32 %s218, 4
          %s229 = int_to_ptr.vmem [resolvable:$true] %s228
          %231 = dma.hbm_to_vmem [thread:$0]  %s226, 32, %s229, %s215
        $region32: #{tpu_custom_call.1} parent=27 // pred_fallthru
          _
      $region28: #{tpu_custom_call.1} parent=5 // pred_fallthru
        _
      %p232 = scmp.le.s32.totalorder 1, %s19
      %p233 = scmp.lt.s32.totalorder %s19, 9
      %p234 = pnand %p232, %p233
      %p235 = pneg %p234
      // Predicated region
      $region33: #{tpu_custom_call.1} parent=5 // pred_check
        _
      $region34: #{tpu_custom_call.1} parent=5 // pred_check_branch
        %237 = sbr.rel (%p234) target = $region36
      $region35: #{tpu_custom_call.1} parent=5 // pred_region
        %s238 = ssub.s32 %s19, 1
        // Predicated region
        $region37: #{tpu_custom_call.1} parent=35 // pred_check
          %p239 = pneg %p59
        $region38: #{tpu_custom_call.1} parent=35 // pred_check_branch
          %241 = sbr.rel (%p239) target = $region40
        $region39: #{tpu_custom_call.1} parent=35 // pred_region
          %242 = dma.done [#allocation5], 16
        $region40: #{tpu_custom_call.1} parent=35 // pred_fallthru
          _
        // Predicated region
        $region41: #{tpu_custom_call.1} parent=35 // pred_check
          %p243 = pneg %p80
        $region42: #{tpu_custom_call.1} parent=35 // pred_check_branch
          %245 = sbr.rel (%p243) target = $region44
        $region43: #{tpu_custom_call.1} parent=35 // pred_region
          %246 = dma.done [#allocation6], 16
        $region44: #{tpu_custom_call.1} parent=35 // pred_fallthru
          _
        // Predicated region
        $region45: #{tpu_custom_call.1} parent=35 // pred_check
          %p247 = pneg %p101
        $region46: #{tpu_custom_call.1} parent=35 // pred_check_branch
          %249 = sbr.rel (%p247) target = $region48
        $region47: #{tpu_custom_call.1} parent=35 // pred_region
          %250 = dma.done [#allocation9], 64
        $region48: #{tpu_custom_call.1} parent=35 // pred_fallthru
          _
        %s251 = sand.u32 %s118, 1
        %s252 = scalar_lea.sflag [#allocation3], %s251
        %s253 = sand.u32 %s118, 1
        %s254 = smul.addr %s253, 2
        %s255 = scalar_lea.vmem [#allocation10], %s254
        // Predicated region
        $region49: #{tpu_custom_call.1} parent=35 // pred_check
          %p256 = pneg %p131
        $region50: #{tpu_custom_call.1} parent=35 // pred_check_branch
          %258 = sbr.rel (%p256) target = $region52
        $region51: #{tpu_custom_call.1} parent=35 // pred_region
          %259 = dma.done %s252, 32
        $region52: #{tpu_custom_call.1} parent=35 // pred_fallthru
          _
        %260 = sfence
        %p261 = pneg %p59
        %p262 = pneg %p56
        %p263 = pneg %p80
        %p264 = pneg %p77
        %p265 = pneg %p101
        %p266 = pneg %p98
        %s267 = sand.u32 %s118, 1
        %s268 = scalar_lea.sflag [#allocation3], %s267
        %s269 = sand.u32 %s118, 1
        %s270 = smul.addr %s269, 2
        %s271 = scalar_lea.vmem [#allocation10], %s270
        %p272 = pneg %p131
        %p273 = pneg %p128
        %p274 = pneg %p161
        %p275 = pneg %p158
        %s276 = sand.u32 %s148, 1
        %s277 = scalar_lea.sflag [#allocation4], %s276
        %s278 = sand.u32 %s148, 1
        %s279 = smul.addr %s278, 2
        %s280 = scalar_lea.vmem [#allocation11], %s279
        %s281 = sld [smem:[#allocation2 + %s31]]
        %s282 = sld [smem:[#allocation7 + %s31]]
        %v283 = vld [vmem:[%s255] sm:$0x3]
        %v284 = vstv %s281
        %v285 = vmul.f32 %v283, %v284
        %v286 = vstv %s282
        %v287 = vadd.f32 %v285, %v286
        %s288 = smul.u32 %s31, 128
        %s289 = sld [smem:[#allocation8 + %s288]]
        %v290 = vmax.f32 %v283, -3.84
        %v291 = vstv %s289
        %v292 = vmul.f32 %v291, %v290
        %v293 = vadd.f32 %v287, %v292
        %s294 = sadd.s32 %s288, 1
        %s295 = sld [smem:[#allocation8 + %s294]]
        %v296 = vmax.f32 %v283, -3.68
        %v297 = vstv %s295
        %v298 = vmul.f32 %v297, %v296
        %v299 = vadd.f32 %v293, %v298
        %s300 = sadd.s32 %s288, 2
        %s301 = sld [smem:[#allocation8 + %s300]]
        %v302 = vmax.f32 %v283, -3.52
        %v303 = vstv %s301
        %v304 = vmul.f32 %v303, %v302
        %v305 = vadd.f32 %v299, %v304
        %s306 = sadd.s32 %s288, 3
        %s307 = sld [smem:[#allocation8 + %s306]]
        %v308 = vmax.f32 %v283, -3.36
        %v309 = vstv %s307
        %v310 = vmul.f32 %v309, %v308
        %v311 = vadd.f32 %v305, %v310
        %s312 = sadd.s32 %s288, 4
        %s313 = sld [smem:[#allocation8 + %s312]]
        %v314 = vmax.f32 %v283, -3.2
        %v315 = vstv %s313
        %v316 = vmul.f32 %v315, %v314
        %v317 = vadd.f32 %v311, %v316
        %s318 = sadd.s32 %s288, 5
        %s319 = sld [smem:[#allocation8 + %s318]]
        %v320 = vmax.f32 %v283, -3.04
        %v321 = vstv %s319
        %v322 = vmul.f32 %v321, %v320
        %v323 = vadd.f32 %v317, %v322
        %s324 = sadd.s32 %s288, 6
        %s325 = sld [smem:[#allocation8 + %s324]]
        %v326 = vmax.f32 %v283, -2.88
        %v327 = vstv %s325
        %v328 = vmul.f32 %v327, %v326
        %v329 = vadd.f32 %v323, %v328
        %s330 = sadd.s32 %s288, 7
        %s331 = sld [smem:[#allocation8 + %s330]]
        %v332 = vmax.f32 %v283, -2.72
        %v333 = vstv %s331
        %v334 = vmul.f32 %v333, %v332
        %v335 = vadd.f32 %v329, %v334
        %s336 = sadd.s32 %s288, 8
        %s337 = sld [smem:[#allocation8 + %s336]]
        %v338 = vmax.f32 %v283, -2.56
        %v339 = vstv %s337
        %v340 = vmul.f32 %v339, %v338
        %v341 = vadd.f32 %v335, %v340
        %s342 = sadd.s32 %s288, 9
        %s343 = sld [smem:[#allocation8 + %s342]]
        %v344 = vmax.f32 %v283, -2.4
        %v345 = vstv %s343
        %v346 = vmul.f32 %v345, %v344
        %v347 = vadd.f32 %v341, %v346
        %s348 = sadd.s32 %s288, 10
        %s349 = sld [smem:[#allocation8 + %s348]]
        %v350 = vmax.f32 %v283, -2.24
        %v351 = vstv %s349
        %v352 = vmul.f32 %v351, %v350
        %v353 = vadd.f32 %v347, %v352
        %s354 = sadd.s32 %s288, 11
        %s355 = sld [smem:[#allocation8 + %s354]]
        %v356 = vmax.f32 %v283, -2.08
        %v357 = vstv %s355
        %v358 = vmul.f32 %v357, %v356
        %v359 = vadd.f32 %v353, %v358
        %s360 = sadd.s32 %s288, 12
        %s361 = sld [smem:[#allocation8 + %s360]]
        %v362 = vmax.f32 %v283, -1.92
        %v363 = vstv %s361
        %v364 = vmul.f32 %v363, %v362
        %v365 = vadd.f32 %v359, %v364
        %s366 = sadd.s32 %s288, 13
        %s367 = sld [smem:[#allocation8 + %s366]]
        %v368 = vmax.f32 %v283, -1.76
        %v369 = vstv %s367
        %v370 = vmul.f32 %v369, %v368
        %v371 = vadd.f32 %v365, %v370
        %s372 = sadd.s32 %s288, 14
        %s373 = sld [smem:[#allocation8 + %s372]]
        %v374 = vmax.f32 %v283, -1.6
        %v375 = vstv %s373
        %v376 = vmul.f32 %v375, %v374
        %v377 = vadd.f32 %v371, %v376
        %s378 = sadd.s32 %s288, 15
        %s379 = sld [smem:[#allocation8 + %s378]]
        %v380 = vmax.f32 %v283, -1.44
        %v381 = vstv %s379
        %v382 = vmul.f32 %v381, %v380
        %v383 = vadd.f32 %v377, %v382
        %s384 = sadd.s32 %s288, 16
        %s385 = sld [smem:[#allocation8 + %s384]]
        %v386 = vmax.f32 %v283, -1.28
        %v387 = vstv %s385
        %v388 = vmul.f32 %v387, %v386
        %v389 = vadd.f32 %v383, %v388
        %s390 = sadd.s32 %s288, 17
        %s391 = sld [smem:[#allocation8 + %s390]]
        %v392 = vmax.f32 %v283, -1.12
        %v393 = vstv %s391
        %v394 = vmul.f32 %v393, %v392
        %v395 = vadd.f32 %v389, %v394
        %s396 = sadd.s32 %s288, 18
        %s397 = sld [smem:[#allocation8 + %s396]]
        %v398 = vmax.f32 %v283, -0.96
        %v399 = vstv %s397
        %v400 = vmul.f32 %v399, %v398
        %v401 = vadd.f32 %v395, %v400
        %s402 = sadd.s32 %s288, 19
        %s403 = sld [smem:[#allocation8 + %s402]]
        %v404 = vmax.f32 %v283, -0.8
        %v405 = vstv %s403
        %v406 = vmul.f32 %v405, %v404
        %v407 = vadd.f32 %v401, %v406
        %s408 = sadd.s32 %s288, 20
        %s409 = sld [smem:[#allocation8 + %s408]]
        %v410 = vmax.f32 %v283, -0.64
        %v411 = vstv %s409
        %v412 = vmul.f32 %v411, %v410
        %v413 = vadd.f32 %v407, %v412
        %s414 = sadd.s32 %s288, 21
        %s415 = sld [smem:[#allocation8 + %s414]]
        %v416 = vmax.f32 %v283, -0.48
        %v417 = vstv %s415
        %v418 = vmul.f32 %v417, %v416
        %v419 = vadd.f32 %v413, %v418
        %s420 = sadd.s32 %s288, 22
        %s421 = sld [smem:[#allocation8 + %s420]]
        %v422 = vmax.f32 %v283, -0.32
        %v423 = vstv %s421
        %v424 = vmul.f32 %v423, %v422
        %v425 = vadd.f32 %v419, %v424
        %s426 = sadd.s32 %s288, 23
        %s427 = sld [smem:[#allocation8 + %s426]]
        %v428 = vmax.f32 %v283, -0.16
        %v429 = vstv %s427
        %v430 = vmul.f32 %v429, %v428
        %v431 = vadd.f32 %v425, %v430
        %s432 = sadd.s32 %s288, 24
        %s433 = sld [smem:[#allocation8 + %s432]]
        %v434 = vmax.f32 %v283, 0.0
        %v435 = vstv %s433
        %v436 = vmul.f32 %v435, %v434
        %v437 = vadd.f32 %v431, %v436
        %s438 = sadd.s32 %s288, 25
        %s439 = sld [smem:[#allocation8 + %s438]]
        %v440 = vmax.f32 %v283, 0.16
        %v441 = vstv %s439
        %v442 = vmul.f32 %v441, %v440
        %v443 = vadd.f32 %v437, %v442
        %s444 = sadd.s32 %s288, 26
        %s445 = sld [smem:[#allocation8 + %s444]]
        %v446 = vmax.f32 %v283, 0.32
        %v447 = vstv %s445
        %v448 = vmul.f32 %v447, %v446
        %v449 = vadd.f32 %v443, %v448
        %s450 = sadd.s32 %s288, 27
        %s451 = sld [smem:[#allocation8 + %s450]]
        %v452 = vmax.f32 %v283, 0.48
        %v453 = vstv %s451
        %v454 = vmul.f32 %v453, %v452
        %v455 = vadd.f32 %v449, %v454
        %s456 = sadd.s32 %s288, 28
        %s457 = sld [smem:[#allocation8 + %s456]]
        %v458 = vmax.f32 %v283, 0.64
        %v459 = vstv %s457
        %v460 = vmul.f32 %v459, %v458
        %v461 = vadd.f32 %v455, %v460
        %s462 = sadd.s32 %s288, 29
        %s463 = sld [smem:[#allocation8 + %s462]]
        %v464 = vmax.f32 %v283, 0.8
        %v465 = vstv %s463
        %v466 = vmul.f32 %v465, %v464
        %v467 = vadd.f32 %v461, %v466
        %s468 = sadd.s32 %s288, 30
        %s469 = sld [smem:[#allocation8 + %s468]]
        %v470 = vmax.f32 %v283, 0.96
        %v471 = vstv %s469
        %v472 = vmul.f32 %v471, %v470
        %v473 = vadd.f32 %v467, %v472
        %s474 = sadd.s32 %s288, 31
        %s475 = sld [smem:[#allocation8 + %s474]]
        %v476 = vmax.f32 %v283, 1.12
        %v477 = vstv %s475
        %v478 = vmul.f32 %v477, %v476
        %v479 = vadd.f32 %v473, %v478
        %s480 = sadd.s32 %s288, 32
        %s481 = sld [smem:[#allocation8 + %s480]]
        %v482 = vmax.f32 %v283, 1.28
        %v483 = vstv %s481
        %v484 = vmul.f32 %v483, %v482
        %v485 = vadd.f32 %v479, %v484
        %s486 = sadd.s32 %s288, 33
        %s487 = sld [smem:[#allocation8 + %s486]]
        %v488 = vmax.f32 %v283, 1.44
        %v489 = vstv %s487
        %v490 = vmul.f32 %v489, %v488
        %v491 = vadd.f32 %v485, %v490
        %s492 = sadd.s32 %s288, 34
        %s493 = sld [smem:[#allocation8 + %s492]]
        %v494 = vmax.f32 %v283, 1.6
        %v495 = vstv %s493
        %v496 = vmul.f32 %v495, %v494
        %v497 = vadd.f32 %v491, %v496
        %s498 = sadd.s32 %s288, 35
        %s499 = sld [smem:[#allocation8 + %s498]]
        %v500 = vmax.f32 %v283, 1.76
        %v501 = vstv %s499
        %v502 = vmul.f32 %v501, %v500
        %v503 = vadd.f32 %v497, %v502
        %s504 = sadd.s32 %s288, 36
        %s505 = sld [smem:[#allocation8 + %s504]]
        %v506 = vmax.f32 %v283, 1.92
        %v507 = vstv %s505
        %v508 = vmul.f32 %v507, %v506
        %v509 = vadd.f32 %v503, %v508
        %s510 = sadd.s32 %s288, 37
        %s511 = sld [smem:[#allocation8 + %s510]]
        %v512 = vmax.f32 %v283, 2.08
        %v513 = vstv %s511
        %v514 = vmul.f32 %v513, %v512
        %v515 = vadd.f32 %v509, %v514
        %s516 = sadd.s32 %s288, 38
        %s517 = sld [smem:[#allocation8 + %s516]]
        %v518 = vmax.f32 %v283, 2.24
        %v519 = vstv %s517
        %v520 = vmul.f32 %v519, %v518
        %v521 = vadd.f32 %v515, %v520
        %s522 = sadd.s32 %s288, 39
        %s523 = sld [smem:[#allocation8 + %s522]]
        %v524 = vmax.f32 %v283, 2.4
        %v525 = vstv %s523
        %v526 = vmul.f32 %v525, %v524
        %v527 = vadd.f32 %v521, %v526
        %s528 = sadd.s32 %s288, 40
        %s529 = sld [smem:[#allocation8 + %s528]]
        %v530 = vmax.f32 %v283, 2.56
        %v531 = vstv %s529
        %v532 = vmul.f32 %v531, %v530
        %v533 = vadd.f32 %v527, %v532
        %s534 = sadd.s32 %s288, 41
        %s535 = sld [smem:[#allocation8 + %s534]]
        %v536 = vmax.f32 %v283, 2.72
        %v537 = vstv %s535
        %v538 = vmul.f32 %v537, %v536
        %v539 = vadd.f32 %v533, %v538
        %s540 = sadd.s32 %s288, 42
        %s541 = sld [smem:[#allocation8 + %s540]]
        %v542 = vmax.f32 %v283, 2.88
        %v543 = vstv %s541
        %v544 = vmul.f32 %v543, %v542
        %v545 = vadd.f32 %v539, %v544
        %s546 = sadd.s32 %s288, 43
        %s547 = sld [smem:[#allocation8 + %s546]]
        %v548 = vmax.f32 %v283, 3.04
        %v549 = vstv %s547
        %v550 = vmul.f32 %v549, %v548
        %v551 = vadd.f32 %v545, %v550
        %s552 = sadd.s32 %s288, 44
        %s553 = sld [smem:[#allocation8 + %s552]]
        %v554 = vmax.f32 %v283, 3.2
        %v555 = vstv %s553
        %v556 = vmul.f32 %v555, %v554
        %v557 = vadd.f32 %v551, %v556
        %s558 = sadd.s32 %s288, 45
        %s559 = sld [smem:[#allocation8 + %s558]]
        %v560 = vmax.f32 %v283, 3.36
        %v561 = vstv %s559
        %v562 = vmul.f32 %v561, %v560
        %v563 = vadd.f32 %v557, %v562
        %s564 = sadd.s32 %s288, 46
        %s565 = sld [smem:[#allocation8 + %s564]]
        %v566 = vmax.f32 %v283, 3.52
        %v567 = vstv %s565
        %v568 = vmul.f32 %v567, %v566
        %v569 = vadd.f32 %v563, %v568
        %s570 = sadd.s32 %s288, 47
        %s571 = sld [smem:[#allocation8 + %s570]]
        %v572 = vmax.f32 %v283, 3.68
        %v573 = vstv %s571
        %v574 = vmul.f32 %v573, %v572
        %v575 = vadd.f32 %v569, %v574
        %s576 = sadd.s32 %s288, 48
        %s577 = sld [smem:[#allocation8 + %s576]]
        %v578 = vmax.f32 %v283, 3.84
        %v579 = vstv %s577
        %v580 = vmul.f32 %v579, %v578
        %v581 = vadd.f32 %v575, %v580
        %582 = vst [vmem:[%s280] sm:$0x3] %v581
        %s583 = sand.u32 %s148, 1
        %s584 = scalar_lea.sflag [#allocation4], %s583
        %s585 = sand.u32 %s148, 1
        %s586 = smul.addr %s585, 2
        %s587 = scalar_lea.vmem [#allocation11], %s586
        // Predicated region
        $region53: #{tpu_custom_call.1} parent=35 // pred_check
          %p588 = pneg %p158
        $region54: #{tpu_custom_call.1} parent=35 // pred_check_branch
          %590 = sbr.rel (%p588) target = $region56
        $region55: #{tpu_custom_call.1} parent=35 // pred_region
          %s592 = ssub.s32 32, 32
          %593 = vsyncadd %s584, %s592
          %s594 = sadd.s32 %s29, %s31
          %s595 = smul.addr %s30, 4
          %s596 = sadd.s32 %s594, %s595
          %s597 = smul.addr %s596, 32
          %s598 = scalar_lea.hbm %s4, %s597
          %s600 = sshll.u32 %s587, 4
          %s601 = int_to_ptr.vmem [resolvable:$true] %s600
          %603 = dma.vmem_to_hbm [thread:$0]  %s601, 32, %s598, %s584
        $region56: #{tpu_custom_call.1} parent=35 // pred_fallthru
          _
      $region36: #{tpu_custom_call.1} parent=5 // pred_fallthru
        _
      %p604 = scmp.le.s32.totalorder 2, %s19
      // Predicated region
      $region57: #{tpu_custom_call.1} parent=5 // pred_check
        %p605 = pneg %p604
      $region58: #{tpu_custom_call.1} parent=5 // pred_check_branch
        %607 = sbr.rel (%p605) target = $region60
      $region59: #{tpu_custom_call.1} parent=5 // pred_region
        %s608 = ssub.s32 %s19, 2
        // Predicated region
        $region61: #{tpu_custom_call.1} parent=59 // pred_check
          %p609 = pneg %p164
        $region62: #{tpu_custom_call.1} parent=59 // pred_check_branch
          %611 = sbr.rel (%p609) target = $region64
        $region63: #{tpu_custom_call.1} parent=59 // pred_region
          %s612 = sand.u32 %s149, 1
          %s613 = scalar_lea.sflag [#allocation4], %s612
          %s614 = sand.u32 %s149, 1
          %s615 = smul.addr %s614, 2
          %s616 = scalar_lea.vmem [#allocation11], %s615
          %617 = dma.done %s613, 32
        $region64: #{tpu_custom_call.1} parent=59 // pred_fallthru
          _
      $region60: #{tpu_custom_call.1} parent=5 // pred_fallthru
        _
    $region6: #{tpu_custom_call.1} parent=1 // loop_footer
      %s23 = sadd.s32 1, %s19
    $region7: #{tpu_custom_call.1} parent=1 // loop_footer_branch
      %18 = sbr.rel target = $region3
    $region8: #{tpu_custom_call.1} parent=1 // loop_exit
      _
    %618 = vsyncpa [#allocation3], 1
    %s619 = scalar_lea.sflag [#allocation3], 1
    %620 = vsyncpa %s619, 1
    %621 = vsyncpa [#allocation4], 1
    %s622 = scalar_lea.sflag [#allocation4], 1
    %623 = vsyncpa %s622, 1
    %624 = vsyncpa [#allocation5], 1
    %s625 = scalar_lea.sflag [#allocation5], 1
    %626 = vsyncpa %s625, 1
    %627 = vsyncpa [#allocation6], 1
    %s628 = scalar_lea.sflag [#allocation6], 1
    %629 = vsyncpa %s628, 1
    %630 = vsyncpa [#allocation9], 1

</llo_original>
